<compile_context>
chip_gen: v7x
topology: tpu7x:2x2x1
jax: 0.10.0
libtpu: 0.0.40
codegen_flags: <defaults>
</compile_context>

<pallas_src>
import jax
import jax.numpy as jnp
from jax.experimental import pallas as pl
from jax.experimental.pallas import tpu as pltpu


def _patch_adv_loss_kernel(lg_caric_ref, lg_photo_ref, lg_gen_ref,
                           out_ref, stacked_ref):
    # lg_*_ref:    VMEM (B, C)      logits (any float dtype; upcast below)
    # out_ref:     SMEM (2,)  f32   -> [loss_D, loss_G]
    # stacked_ref: VMEM (3B, C) f32 scratch used to fuse the three CE passes
    B, C = lg_caric_ref.shape

    # Pack the three logit blocks contiguously (rows 0..B-1: caric,
    # B..2B-1: photo, 2B..3B-1: generated).  Upcast to f32 in-kernel.
    stacked_ref[pl.ds(0 * B, B), :] = lg_caric_ref[...].astype(jnp.float32)
    stacked_ref[pl.ds(1 * B, B), :] = lg_photo_ref[...].astype(jnp.float32)
    stacked_ref[pl.ds(2 * B, B), :] = lg_gen_ref[...].astype(jnp.float32)
    lg = stacked_ref[...]                                        # (3B, C) f32

    # One numerically-stable log-sum-exp over the class (lane) axis for all
    # 3B rows at once.
    m = jnp.max(lg, axis=-1, keepdims=True)                      # (3B, 1)
    lse = jnp.log(jnp.sum(jnp.exp(lg - m), axis=-1,
                          keepdims=True)) + m                    # (3B, 1)

    # Constant discriminator targets: 0 for caric rows, 1 for photo rows,
    # 2 for generated rows.  Select the target logit with a masked reduce
    # (matches take_along_axis semantics; no NaN leakage from other classes).
    row = jax.lax.broadcasted_iota(jnp.int32, (3 * B, C), 0)
    cls = jax.lax.broadcasted_iota(jnp.int32, (3 * B, C), 1)
    label_d = (row >= B).astype(jnp.int32) + (row >= 2 * B).astype(jnp.int32)
    picked_d = jnp.sum(jnp.where(cls == label_d, lg, 0.0),
                       axis=-1, keepdims=True)                   # (3B, 1)

    inv_b = jnp.float32(1.0 / B)          # compile-time constant; no divides
    loss_d = jnp.sum(lse - picked_d) * inv_b

    # Generator loss: CE(logits_generated_caric, target = 0).
    lg_gen = lg[2 * B:3 * B, :]
    lse_gen = lse[2 * B:3 * B, :]
    cls_g = jax.lax.broadcasted_iota(jnp.int32, (B, C), 1)
    picked_g = jnp.sum(jnp.where(cls_g == 0, lg_gen, 0.0),
                       axis=-1, keepdims=True)                   # (B, 1)
    loss_g = jnp.sum(lse_gen - picked_g) * inv_b

    out_ref[0] = loss_d
    out_ref[1] = loss_g


def patch_adversarial_loss(logits_caric, logits_photo, logits_generated_caric):
    """Inputs: three (B, C) logit arrays (B = (H/32)*(W/32) patches, C classes).

    Returns (loss_D, loss_G) as f32 scalars.
    """
    B, C = logits_caric.shape
    itemsize = jnp.dtype(logits_caric.dtype).itemsize
    cost = pl.CostEstimate(
        flops=6 * 3 * B * C,                  # sub, exp-scale, mask, reduces, ...
        transcendentals=3 * B * (C + 1),      # exp per element + log per row
        bytes_accessed=3 * B * C * itemsize + 2 * 4,
    )

    losses = pl.pallas_call(
        _patch_adv_loss_kernel,
        out_shape=jax.ShapeDtypeStruct((2,), jnp.float32),
        in_specs=[
            pl.BlockSpec(memory_space=pltpu.VMEM),
            pl.BlockSpec(memory_space=pltpu.VMEM),
            pl.BlockSpec(memory_space=pltpu.VMEM),
        ],
        out_specs=pl.BlockSpec(memory_space=pltpu.SMEM),
        scratch_shapes=[pltpu.VMEM((3 * B, C), jnp.float32)],
        cost_estimate=cost,
    )(logits_caric, logits_photo, logits_generated_caric)

    return losses[0], losses[1]


def _reference(lg_caric, lg_photo, lg_gen):
    """Pure-JAX reference matching the PyTorch module."""
    def ce(lg, target):
        lg = lg.astype(jnp.float32)
        lse = jax.nn.logsumexp(lg, axis=-1)
        return jnp.mean(lse - lg[:, target])

    loss_d = ce(lg_caric, 0) + ce(lg_photo, 1) + ce(lg_gen, 2)
    loss_g = ce(lg_gen, 0)
    return loss_d, loss_g


if __name__ == "__main__":
    # (in_height/32 * in_width/32, in_channels): 128x128 image -> 16 patches,
    # 3 classes (caric / photo / generated).
    in_h = in_w = 128
    n_patches = (in_h // 32) * (in_w // 32)   # 16
    n_classes = 3

    key = jax.random.PRNGKey(0)
    k1, k2, k3 = jax.random.split(key, 3)
    logits_caric = jax.random.normal(k1, (n_patches, n_classes), jnp.float32)
    logits_photo = jax.random.normal(k2, (n_patches, n_classes), jnp.float32)
    logits_generated_caric = jax.random.normal(
        k3, (n_patches, n_classes), jnp.float32)

    loss_D, loss_G = patch_adversarial_loss(
        logits_caric, logits_photo, logits_generated_caric)
    jax.block_until_ready((loss_D, loss_G))

    ref_D, ref_G = _reference(logits_caric, logits_photo, logits_generated_caric)
    assert jnp.allclose(loss_D, ref_D, atol=1e-5, rtol=1e-5), (loss_D, ref_D)
    assert jnp.allclose(loss_G, ref_G, atol=1e-5, rtol=1e-5), (loss_G, ref_G)

    print("KERNEL_OK")
</pallas_src>

<mosaic_0001>
module attributes {stable_mosaic.version = 11 : i64} {
  func.func @_patch_adv_loss_kernel(%arg0: memref<16x3xf32, #tpu.memory_space<vmem>>, %arg1: memref<16x3xf32, #tpu.memory_space<vmem>>, %arg2: memref<16x3xf32, #tpu.memory_space<vmem>>, %arg3: memref<2xf32, #tpu.memory_space<smem>>, %arg4: memref<48x3xf32, #tpu.memory_space<vmem>>) attributes {dimension_semantics = [], scalar_prefetch = 0 : i64, scratch_operands = 1 : i64, tpu.core_type = #tpu.core_type<tc>} {
    %c0 = arith.constant 0 : index
    %c0_0 = arith.constant 0 : index
    %0 = vector.load %arg0[%c0, %c0_0] : memref<16x3xf32, #tpu.memory_space<vmem>>, vector<16x3xf32>
    %c0_1 = arith.constant 0 : index
    %c0_2 = arith.constant 0 : index
    %1 = vector.load %arg4[%c0_1, %c0_2] : memref<48x3xf32, #tpu.memory_space<vmem>>, vector<16x3xf32>
    tpu.vector_store %arg4[%c0_1, %c0_2], %0 {strides = array<i32>} : memref<48x3xf32, #tpu.memory_space<vmem>>, vector<16x3xf32>,
    %c0_3 = arith.constant 0 : index
    %c0_4 = arith.constant 0 : index
    %2 = vector.load %arg1[%c0_3, %c0_4] : memref<16x3xf32, #tpu.memory_space<vmem>>, vector<16x3xf32>
    %c16 = arith.constant 16 : index
    %c0_5 = arith.constant 0 : index
    %3 = vector.load %arg4[%c16, %c0_5] : memref<48x3xf32, #tpu.memory_space<vmem>>, vector<16x3xf32>
    tpu.vector_store %arg4[%c16, %c0_5], %2 {strides = array<i32>} : memref<48x3xf32, #tpu.memory_space<vmem>>, vector<16x3xf32>,
    %c0_6 = arith.constant 0 : index
    %c0_7 = arith.constant 0 : index
    %4 = vector.load %arg2[%c0_6, %c0_7] : memref<16x3xf32, #tpu.memory_space<vmem>>, vector<16x3xf32>
    %c32 = arith.constant 32 : index
    %c0_8 = arith.constant 0 : index
    %5 = vector.load %arg4[%c32, %c0_8] : memref<48x3xf32, #tpu.memory_space<vmem>>, vector<16x3xf32>
    tpu.vector_store %arg4[%c32, %c0_8], %4 {strides = array<i32>} : memref<48x3xf32, #tpu.memory_space<vmem>>, vector<16x3xf32>,
    %c0_9 = arith.constant 0 : index
    %c0_10 = arith.constant 0 : index
    %6 = vector.load %arg4[%c0_9, %c0_10] : memref<48x3xf32, #tpu.memory_space<vmem>>, vector<48x3xf32>
    %cst = arith.constant dense<0xFF800000> : vector<48xf32>
    %7 = vector.multi_reduction <maximumf>, %6, %cst [1] : vector<48x3xf32> to vector<48xf32>
    %8 = vector.shape_cast %7 : vector<48xf32> to vector<48x1xf32>
    %9 = vector.broadcast %8 : vector<48x1xf32> to vector<48x3xf32>
    %10 = arith.subf %6, %9 : vector<48x3xf32>
    %11 = math.exp %10 : vector<48x3xf32>
    %cst_11 = arith.constant dense<0.000000e+00> : vector<48xf32>
    %12 = vector.multi_reduction <add>, %11, %cst_11 [1] : vector<48x3xf32> to vector<48xf32>
    %13 = vector.shape_cast %12 : vector<48xf32> to vector<48x1xf32>
    %14 = math.log %13 : vector<48x1xf32>
    %15 = arith.addf %14, %8 : vector<48x1xf32>
    %16 = tpu.iota {dimensions = array<i32: 0>} : vector<48x3xi32>
    %17 = tpu.iota {dimensions = array<i32: 1>} : vector<48x3xi32>
    %c16_i32 = arith.constant 16 : i32
    %18 = vector.broadcast %c16_i32 : i32 to vector<48x3xi32>
    %19 = arith.cmpi sge, %16, %18 : vector<48x3xi32>
    %20 = arith.extui %19 : vector<48x3xi1> to vector<48x3xi32>
    %c32_i32 = arith.constant 32 : i32
    %21 = vector.broadcast %c32_i32 : i32 to vector<48x3xi32>
    %22 = arith.cmpi sge, %16, %21 : vector<48x3xi32>
    %23 = arith.extui %22 : vector<48x3xi1> to vector<48x3xi32>
    %24 = arith.addi %20, %23 : vector<48x3xi32>
    %25 = arith.cmpi eq, %17, %24 : vector<48x3xi32>
    %cst_12 = arith.constant 0.000000e+00 : f32
    %26 = vector.broadcast %cst_12 : f32 to vector<48x3xf32>
    %27 = arith.select %25, %6, %26 : vector<48x3xi1>, vector<48x3xf32>
    %cst_13 = arith.constant dense<0.000000e+00> : vector<48xf32>
    %28 = vector.multi_reduction <add>, %27, %cst_13 [1] : vector<48x3xf32> to vector<48xf32>
    %29 = vector.shape_cast %28 : vector<48xf32> to vector<48x1xf32>
    %30 = arith.subf %15, %29 : vector<48x1xf32>
    %31 = vector.shape_cast %30 : vector<48x1xf32> to vector<1x48x1xf32>
    %cst_14 = arith.constant dense<0.000000e+00> : vector<1xf32>
    %32 = vector.multi_reduction <add>, %31, %cst_14 [1, 2] : vector<1x48x1xf32> to vector<1xf32>
    %33 = vector.shape_cast %32 : vector<1xf32> to vector<1x1x1xf32>
    %34 = vector.extract %33[0, 0, 0] : f32 from vector<1x1x1xf32>
    %cst_15 = arith.constant 6.250000e-02 : f32
    %35 = arith.mulf %34, %cst_15 : f32
    %36 = vector.extract_strided_slice %6 {offsets = [32, 0], sizes = [16, 3], strides = [1, 1]} : vector<48x3xf32> to vector<16x3xf32>
    %37 = vector.extract_strided_slice %15 {offsets = [32, 0], sizes = [16, 1], strides = [1, 1]} : vector<48x1xf32> to vector<16x1xf32>
    %38 = tpu.iota {dimensions = array<i32: 1>} : vector<16x3xi32>
    %c0_i32 = arith.constant 0 : i32
    %39 = vector.broadcast %c0_i32 : i32 to vector<16x3xi32>
    %40 = arith.cmpi eq, %38, %39 : vector<16x3xi32>
    %cst_16 = arith.constant 0.000000e+00 : f32
    %41 = vector.broadcast %cst_16 : f32 to vector<16x3xf32>
    %42 = arith.select %40, %36, %41 : vector<16x3xi1>, vector<16x3xf32>
    %cst_17 = arith.constant dense<0.000000e+00> : vector<16xf32>
    %43 = vector.multi_reduction <add>, %42, %cst_17 [1] : vector<16x3xf32> to vector<16xf32>
    %44 = vector.shape_cast %43 : vector<16xf32> to vector<16x1xf32>
    %45 = arith.subf %37, %44 : vector<16x1xf32>
    %46 = vector.shape_cast %45 : vector<16x1xf32> to vector<1x16x1xf32>
    %cst_18 = arith.constant dense<0.000000e+00> : vector<1xf32>
    %47 = vector.multi_reduction <add>, %46, %cst_18 [1, 2] : vector<1x16x1xf32> to vector<1xf32>
    %48 = vector.shape_cast %47 : vector<1xf32> to vector<1x1x1xf32>
    %49 = vector.extract %48[0, 0, 0] : f32 from vector<1x1x1xf32>
    %cst_19 = arith.constant 6.250000e-02 : f32
    %50 = arith.mulf %49, %cst_19 : f32
    %c0_20 = arith.constant 0 : index
    %51 = memref.load %arg3[%c0_20] : memref<2xf32, #tpu.memory_space<smem>>
    memref.store %35, %arg3[%c0_20] : memref<2xf32, #tpu.memory_space<smem>>
    %c1 = arith.constant 1 : index
    %52 = memref.load %arg3[%c1] : memref<2xf32, #tpu.memory_space<smem>>
    memref.store %50, %arg3[%c1] : memref<2xf32, #tpu.memory_space<smem>>
    return
  }
}

</mosaic_0001>

<llo_original>
// kernel: tpu_custom_call.1
$region0: #{tpu_custom_call.1}
  #allocation0 [shape = 'u32[]', space=smem, size = 0x4, offset = 0x4, fixed_abs, tag = 'smem constant byte address 0x4 - core index']
  #allocation1 [shape = 'u32[144,128]{1,0:T(1,128)}', space=vmem, size = 0x12000, scoped, tag = 'internal scratch']
  #allocation2 [shape = 'f32[48,3]{1,0:T(8,128)}', space=vmem, size = 0x6000, scoped, tag = 'scratch operand']
  %s0 = inlined_call_operand.vmem [shape: f32[16,3], index: 0, kind: input, shape index: {}]
  %s1 = inlined_call_operand.vmem [shape: f32[16,3], index: 1, kind: input, shape index: {}]
  %s2 = inlined_call_operand.vmem [shape: f32[16,3], index: 2, kind: input, shape index: {}]
  %s3 = inlined_call_operand.hbm [shape: f32[2], index: 3, kind: output, shape index: {}]
  %s4 = sld [smem:[#allocation0]]
  $region22: #{tpu_custom_call.1} parent=0
    _
  %s6 = ssub.s32 1, %s4
  %s7 = scalar_select 0, %s6, %s4
  $region1: #{tpu_custom_call.1} parent=0
    #allocation3 [shape = 'u8[512]{0}', space=smem, size = 0x200, scoped, tag = 'output window, operand 0, single buffered']
    #allocation4 [shape = 's32[1]{0}', space=sflag, size = 0x4, scoped, tag = 'scoped memory for tpu_custom_call.1']
    %8 = vsyncpa [#allocation4], 0
    // Predicated region
    $region2: #{tpu_custom_call.1} parent=1 // pred_check
      _
    $region3: #{tpu_custom_call.1} parent=1 // pred_check_branch
      %10 = sbr.rel (0) target = $region5
    $region4: #{tpu_custom_call.1} parent=1 // pred_region
      _
    $region5: #{tpu_custom_call.1} parent=1 // pred_fallthru
      _
    // Predicated region
    $region6: #{tpu_custom_call.1} parent=1 // pred_check
      _
    $region7: #{tpu_custom_call.1} parent=1 // pred_check_branch
      %12 = sbr.rel (0) target = $region9
    $region8: #{tpu_custom_call.1} parent=1 // pred_region
      _
    $region9: #{tpu_custom_call.1} parent=1 // pred_fallthru
      _
    // Predicated region
    $region10: #{tpu_custom_call.1} parent=1 // pred_check
      _
    $region11: #{tpu_custom_call.1} parent=1 // pred_check_branch
      %14 = sbr.rel (0) target = $region13
    $region12: #{tpu_custom_call.1} parent=1 // pred_region
      _
    $region13: #{tpu_custom_call.1} parent=1 // pred_fallthru
      _
    %v15 = vld [vmem:[%s0] sm:$0xff]
    %v16 = vld [vmem:[%s0 + $0x8] sm:$0xff]
    %vm17 = vcmask 23552
    %18 = vst.msk [vmem:[#allocation2] sm:$0xff] %vm17, %v15
    %19 = vst.msk [vmem:[#allocation2 + $0x8] sm:$0xff] %vm17, %v16
    %v20 = vld [vmem:[%s1] sm:$0xff]
    %v21 = vld [vmem:[%s1 + $0x8] sm:$0xff]
    %22 = vst.msk [vmem:[#allocation2 + $0x10] sm:$0xff] %vm17, %v20
    %23 = vst.msk [vmem:[#allocation2 + $0x18] sm:$0xff] %vm17, %v21
    %v24 = vld [vmem:[%s2] sm:$0xff]
    %v25 = vld [vmem:[%s2 + $0x8] sm:$0xff]
    %26 = vst.msk [vmem:[#allocation2 + $0x20] sm:$0xff] %vm17, %v24
    %27 = vst.msk [vmem:[#allocation2 + $0x28] sm:$0xff] %vm17, %v25
    %v28 = vld [vmem:[#allocation2] sm:$0xff]
    %v29 = vld [vmem:[#allocation2 + $0x8] sm:$0xff]
    %v30 = vld [vmem:[#allocation2 + $0x10] sm:$0xff]
    %v31 = vld [vmem:[#allocation2 + $0x18] sm:$0xff]
    %v32 = vld [vmem:[#allocation2 + $0x20] sm:$0xff]
    %v33 = vld [vmem:[#allocation2 + $0x28] sm:$0xff]
    %v34 = vsel %vm17, %v28, -inf
    %35 = vmax.xlane.f32.xlu0 %v34
    %v36 = vpop.xlane.xlu0 %35
    %v37 = vsel %vm17, %v29, -inf
    %38 = vmax.xlane.f32.xlu0 %v37
    %v39 = vpop.xlane.xlu0 %38
    %v40 = vsel %vm17, %v30, -inf
    %41 = vmax.xlane.f32.xlu0 %v40
    %v42 = vpop.xlane.xlu0 %41
    %v43 = vsel %vm17, %v31, -inf
    %44 = vmax.xlane.f32.xlu0 %v43
    %v45 = vpop.xlane.xlu0 %44
    %v46 = vsel %vm17, %v32, -inf
    %47 = vmax.xlane.f32.xlu0 %v46
    %v48 = vpop.xlane.xlu0 %47
    %v49 = vsel %vm17, %v33, -inf
    %50 = vmax.xlane.f32.xlu0 %v49
    %v51 = vpop.xlane.xlu0 %50
    %v52 = vsub.f32 %v28, %v36
    %v53 = vsub.f32 %v29, %v39
    %v54 = vsub.f32 %v30, %v42
    %v55 = vsub.f32 %v31, %v45
    %v56 = vsub.f32 %v32, %v48
    %v57 = vsub.f32 %v33, %v51
    %v58 = vmul.f32 %v52, 1.442695
    %v59 = vpow.pop %v58
    %v60 = vmul.f32 %v53, 1.442695
    %v61 = vpow.pop %v60
    %v62 = vmul.f32 %v54, 1.442695
    %v63 = vpow.pop %v62
    %v64 = vmul.f32 %v55, 1.442695
    %v65 = vpow.pop %v64
    %v66 = vmul.f32 %v56, 1.442695
    %v67 = vpow.pop %v66
    %v68 = vmul.f32 %v57, 1.442695
    %v69 = vpow.pop %v68
    %v70 = vsel %vm17, %v59, 0.0
    %71 = vadd.xlane.f32.xlu0 %v70
    %v72 = vpop.xlane.xlu0 %71
    %v73 = vsel %vm17, %v61, 0.0
    %74 = vadd.xlane.f32.xlu0 %v73
    %v75 = vpop.xlane.xlu0 %74
    %v76 = vsel %vm17, %v63, 0.0
    %77 = vadd.xlane.f32.xlu0 %v76
    %v78 = vpop.xlane.xlu0 %77
    %v79 = vsel %vm17, %v65, 0.0
    %80 = vadd.xlane.f32.xlu0 %v79
    %v81 = vpop.xlane.xlu0 %80
    %v82 = vsel %vm17, %v67, 0.0
    %83 = vadd.xlane.f32.xlu0 %v82
    %v84 = vpop.xlane.xlu0 %83
    %v85 = vsel %vm17, %v69, 0.0
    %86 = vadd.xlane.f32.xlu0 %v85
    %v87 = vpop.xlane.xlu0 %86
    %v88 = vlog2.pop %v72
    %v89 = vmul.f32 %v88, 0.6931472
    %v90 = vlog2.pop %v75
    %v91 = vmul.f32 %v90, 0.6931472
    %v92 = vlog2.pop %v78
    %v93 = vmul.f32 %v92, 0.6931472
    %v94 = vlog2.pop %v81
    %v95 = vmul.f32 %v94, 0.6931472
    %v96 = vlog2.pop %v84
    %v97 = vmul.f32 %v96, 0.6931472
    %v98 = vlog2.pop %v87
    %v99 = vmul.f32 %v98, 0.6931472
    %v100 = vadd.f32 %v89, %v36
    %v101 = vadd.f32 %v91, %v39
    %v102 = vadd.f32 %v93, %v42
    %v103 = vadd.f32 %v95, %v45
    %v104 = vadd.f32 %v97, %v48
    %v105 = vadd.f32 %v99, %v51
    %v106 = vlaneseq
    %v107 = vshrl.u32 %v106, 7
    %v108 = vadd.s32 %v107, 8
    %v109 = vadd.s32 %v107, 16
    %v110 = vadd.s32 %v107, 24
    %v111 = vadd.s32 %v107, 32
    %v112 = vadd.s32 %v107, 40
    %v113 = vlaneseq
    %v114 = vand.u32 %v113, 127
    %vm115 = vcmp.ge.s32.totalorder %v107, 16
    %vm116 = vcmp.ge.s32.totalorder %v108, 16
    %vm117 = vcmp.ge.s32.totalorder %v109, 16
    %vm118 = vcmp.ge.s32.totalorder %v110, 16
    %vm119 = vcmp.ge.s32.totalorder %v111, 16
    %vm120 = vcmp.ge.s32.totalorder %v112, 16
    %v121 = vsel %vm115, 1, 0
    %v122 = vsel %vm116, 1, 0
    %v123 = vsel %vm117, 1, 0
    %v124 = vsel %vm118, 1, 0
    %v125 = vsel %vm119, 1, 0
    %v126 = vsel %vm120, 1, 0
    %vm127 = vcmp.ge.s32.totalorder %v107, 32
    %vm128 = vcmp.ge.s32.totalorder %v108, 32
    %vm129 = vcmp.ge.s32.totalorder %v109, 32
    %vm130 = vcmp.ge.s32.totalorder %v110, 32
    %vm131 = vcmp.ge.s32.totalorder %v111, 32
    %vm132 = vcmp.ge.s32.totalorder %v112, 32
    %v133 = vsel %vm127, 1, 0
    %v134 = vsel %vm128, 1, 0
    %v135 = vsel %vm129, 1, 0
    %v136 = vsel %vm130, 1, 0
    %v137 = vsel %vm131, 1, 0
    %v138 = vsel %vm132, 1, 0
    %v139 = vadd.s32 %v121, %v133
    %v140 = vadd.s32 %v122, %v134
    %v141 = vadd.s32 %v123, %v135
    %v142 = vadd.s32 %v124, %v136
    %v143 = vadd.s32 %v125, %v137
    %v144 = vadd.s32 %v126, %v138
    %vm145 = vcmp.eq.s32.totalorder %v114, %v139
    %vm146 = vcmp.eq.s32.totalorder %v114, %v140
    %vm147 = vcmp.eq.s32.totalorder %v114, %v141
    %vm148 = vcmp.eq.s32.totalorder %v114, %v142
    %vm149 = vcmp.eq.s32.totalorder %v114, %v143
    %vm150 = vcmp.eq.s32.totalorder %v114, %v144
    %v151 = vsel %vm145, %v28, 0.0
    %v152 = vsel %vm146, %v29, 0.0
    %v153 = vsel %vm147, %v30, 0.0
    %v154 = vsel %vm148, %v31, 0.0
    %v155 = vsel %vm149, %v32, 0.0
    %v156 = vsel %vm150, %v33, 0.0
    %v157 = vsel %vm17, %v151, 0.0
    %158 = vadd.xlane.f32.xlu0 %v157
    %v159 = vpop.xlane.xlu0 %158
    %v160 = vsel %vm17, %v152, 0.0
    %161 = vadd.xlane.f32.xlu0 %v160
    %v162 = vpop.xlane.xlu0 %161
    %v163 = vsel %vm17, %v153, 0.0
    %164 = vadd.xlane.f32.xlu0 %v163
    %v165 = vpop.xlane.xlu0 %164
    %v166 = vsel %vm17, %v154, 0.0
    %167 = vadd.xlane.f32.xlu0 %v166
    %v168 = vpop.xlane.xlu0 %167
    %v169 = vsel %vm17, %v155, 0.0
    %170 = vadd.xlane.f32.xlu0 %v169
    %v171 = vpop.xlane.xlu0 %170
    %v172 = vsel %vm17, %v156, 0.0
    %173 = vadd.xlane.f32.xlu0 %v172
    %v174 = vpop.xlane.xlu0 %173
    %v175 = vsub.f32 %v100, %v159
    %v176 = vsub.f32 %v101, %v162
    %v177 = vsub.f32 %v102, %v165
    %v178 = vsub.f32 %v103, %v168
    %v179 = vsub.f32 %v104, %v171
    %v180 = vsub.f32 %v105, %v174
    %vm181 = vcmask 7168
    %v182 = vsel %vm181, %v175, 0.0
    %v183 = vsel %vm181, %v176, 0.0
    %v184 = vadd.f32 %v182, %v183
    %v185 = vsel %vm181, %v177, 0.0
    %v186 = vadd.f32 %v184, %v185
    %v187 = vsel %vm181, %v178, 0.0
    %v188 = vadd.f32 %v186, %v187
    %v189 = vsel %vm181, %v179, 0.0
    %v190 = vadd.f32 %v188, %v189
    %v191 = vsel %vm181, %v180, 0.0
    %v192 = vadd.f32 %v190, %v191
    %193 = vadd.xlane.f32.xlu0 %v192
    %v194 = vpop.xlane.xlu0 %193
    %v195 = vrot.slane %v194, 4
    %v196 = vadd.f32 %v194, %v195
    %v197 = vrot.slane %v196, 2
    %v198 = vadd.f32 %v196, %v197
    %v199 = vrot.slane %v198, 1
    %v200 = vadd.f32 %v198, %v199
    %s201 = vtos %v200
    %s202 = smul.f32 %s201, 0.0625
    %vm203 = vcmp.eq.s32.totalorder %v114, 0
    %v204 = vsel %vm203, %v32, 0.0
    %v205 = vsel %vm203, %v33, 0.0
    %v206 = vsel %vm17, %v204, 0.0
    %207 = vadd.xlane.f32.xlu0 %v206
    %v208 = vpop.xlane.xlu0 %207
    %v209 = vsel %vm17, %v205, 0.0
    %210 = vadd.xlane.f32.xlu0 %v209
    %v211 = vpop.xlane.xlu0 %210
    %v212 = vsub.f32 %v104, %v208
    %v213 = vsub.f32 %v105, %v211
    %v214 = vsel %vm181, %v212, 0.0
    %v215 = vsel %vm181, %v213, 0.0
    %v216 = vadd.f32 %v214, %v215
    %217 = vadd.xlane.f32.xlu0 %v216
    %v218 = vpop.xlane.xlu0 %217
    %v219 = vrot.slane %v218, 4
    %v220 = vadd.f32 %v218, %v219
    %v221 = vrot.slane %v220, 2
    %v222 = vadd.f32 %v220, %v221
    %v223 = vrot.slane %v222, 1
    %v224 = vadd.f32 %v222, %v223
    %s225 = vtos %v224
    %s226 = smul.f32 %s225, 0.0625
    %s227 = scalar_lea.smem [#allocation3], 0
    %228 = sst [smem:[%s227]] %s202
    %s229 = scalar_lea.smem [#allocation3], 1
    %230 = sst [smem:[%s229]] %s226
    // Predicated region
    $region14: #{tpu_custom_call.1} parent=1 // pred_check
      _
    $region15: #{tpu_custom_call.1} parent=1 // pred_check_branch
      %232 = sbr.rel (0) target = $region17
    $region16: #{tpu_custom_call.1} parent=1 // pred_region
      %s234 = ssub.s32 16, 16
      %235 = vsyncadd [#allocation4], %s234
      %238 = dma.smem_to_hbm [#allocation3], 16, %s3, [#allocation4]
    $region17: #{tpu_custom_call.1} parent=1 // pred_fallthru
      _
    // Predicated region
    $region18: #{tpu_custom_call.1} parent=1 // pred_check
      _
    $region19: #{tpu_custom_call.1} parent=1 // pred_check_branch
      %240 = sbr.rel (0) target = $region21
    $region20: #{tpu_custom_call.1} parent=1 // pred_region
      %241 = dma.done [#allocation4], 16
    $region21: #{tpu_custom_call.1} parent=1 // pred_fallthru
      _
    %242 = sfence
    %243 = vsyncpa [#allocation4], 1

</llo_original>
